<compile_context>
chip_gen: v6e
topology: v6e:2x2x1
jax: 0.10.0
libtpu: 0.0.40
codegen_flags: <defaults>
</compile_context>

<pallas_src>
import math

import jax
import jax.numpy as jnp
from jax import lax
from jax.experimental import pallas as pl
from jax.experimental.pallas import tpu as pltpu

LANE = 128
SUBLANE = 8                 # f32 accumulator layout: output block is (1, 8, 128)
MAX_BLOCK_ROWS = 8192       # (8192, 128) f32 = 4 MiB per input per pipeline buffer

_ARBITRARY = getattr(pltpu, "ARBITRARY", "arbitrary")
_PARALLEL = getattr(pltpu, "PARALLEL", "parallel")
_CORE_PARALLEL = getattr(pltpu, "CORE_PARALLEL", _PARALLEL)


def _cdiv(a: int, b: int) -> int:
    return (a + b - 1) // b


def _round_up(a: int, b: int) -> int:
    return _cdiv(a, b) * b


def _sublane_multiple(*dtypes) -> int:
    """Minimum second-minor tile multiple: 8 for 32-bit, 16 for 16-bit, 32 for 8-bit."""
    m = 8
    for dt in dtypes:
        m = max(m, 32 // max(1, jnp.dtype(dt).itemsize))
    return m


def _core_config():
    """Return (number of cores to shard the stream over, semantics for core axis)."""
    try:
        kind = jax.devices()[0].device_kind.lower()
    except Exception:
        kind = ""
    if "v7" in kind or "7x" in kind:
        # v7x: 2 TensorCores share chip HBM -> force a true cross-core split.
        return 2, _CORE_PARALLEL
    if ("v4" in kind or "v5p" in kind) and "lite" not in kind:
        # Megacore chips: "parallel" grid axes are distributed across fused cores.
        return 2, _PARALLEL
    # v5e / v6e (single TensorCore) and unknown devices: no core axis.
    return 1, _ARBITRARY


def _wing_elementwise(pred, target, w, inv_eps, C):
    d = jnp.abs(target.astype(jnp.float32) - pred.astype(jnp.float32))
    return jnp.where(d < w, w * jnp.log1p(d * inv_eps), d - C)


def _make_wing_kernel(w, inv_eps, C, block_rows, steps, total_rows, mask_needed):
    def wing_kernel(pred_ref, target_ref, out_ref):
        c = pl.program_id(0)   # core shard
        i = pl.program_id(1)   # streaming / reduction step

        @pl.when(i == 0)
        def _():
            out_ref[...] = jnp.zeros_like(out_ref)

        pred = pred_ref[...].astype(jnp.float32)
        target = target_ref[...].astype(jnp.float32)
        delta_y = jnp.abs(target - pred)

        # VPU ops + one EUP log1p; 1/epsilon premultiplied (mul instead of div).
        loss = jnp.where(delta_y < w, w * jnp.log1p(delta_y * inv_eps), delta_y - C)

        if mask_needed:
            # Zero contribution of rows past the logical end (partial last block
            # and any clamped duplicate block).
            row_start = (c * steps + i) * block_rows
            row_ids = lax.broadcasted_iota(jnp.int32, loss.shape, 0) + row_start
            loss = jnp.where(row_ids < total_rows, loss, 0.0)

        # (block_rows, 128) -> (1, 8, 128): layout-preserving vreg-wise adds.
        out_ref[...] += loss.reshape(-1, SUBLANE, LANE).sum(axis=0, keepdims=True)

    return wing_kernel


def wing_loss(pred, target, w: float = 2.0, epsilon: float = 2.0):
    """WingLoss forward. pred/target: arbitrary matching shapes (e.g. NCHW)."""
    assert pred.shape == target.shape
    w = float(w)
    epsilon = float(epsilon)
    C = w - w * math.log(1.0 + w / epsilon)
    inv_eps = 1.0 / epsilon

    n_elems = pred.size  # == len(loss1) + len(loss2) in the PyTorch module

    p = pred.reshape(-1)
    t = target.reshape(-1)

    # Only the 128-aligned bulk streams through the kernel; no jnp.pad HBM copy.
    n_bulk = (n_elems // LANE) * LANE
    rows = n_bulk // LANE
    total = jnp.float32(0.0)

    if rows > 0:
        p2 = p[:n_bulk].reshape(rows, LANE)
        t2 = t[:n_bulk].reshape(rows, LANE)

        sublane = _sublane_multiple(p.dtype, t.dtype)
        block_rows = min(MAX_BLOCK_ROWS, _round_up(rows, sublane))
        total_blocks = _cdiv(rows, block_rows)

        ncores, core_sem = _core_config()
        ncores = max(1, min(ncores, total_blocks))
        if ncores == 1:
            core_sem = _ARBITRARY
        steps = _cdiv(total_blocks, ncores)
        last_block = total_blocks - 1

        exact = (total_blocks == ncores * steps)
        mask_needed = (rows % block_rows != 0) or (not exact)

        if exact:
            def in_map(c, i):
                return (c * steps + i, 0)
        else:
            def in_map(c, i):
                # Clamp out-of-range steps to the last block; in-kernel row mask
                # zeroes their contribution.
                return (jnp.minimum(c * steps + i, last_block), 0)

        kernel = _make_wing_kernel(w, inv_eps, C, block_rows, steps, rows, mask_needed)

        spec_kwargs = {}
        if steps >= 3:
            # Pure streaming, short compute per step: 3-deep buffering hides
            # DMA-issue latency. Only worth it with enough steps.
            spec_kwargs["pipeline_mode"] = pl.Buffered(3)
        in_specs = [
            pl.BlockSpec((block_rows, LANE), in_map, **spec_kwargs),
            pl.BlockSpec((block_rows, LANE), in_map, **spec_kwargs),
        ]

        bytes_in = n_bulk * (jnp.dtype(p.dtype).itemsize + jnp.dtype(t.dtype).itemsize)
        cost = pl.CostEstimate(
            flops=10 * n_bulk,
            transcendentals=n_bulk,
            bytes_accessed=bytes_in + ncores * SUBLANE * LANE * 4,
        )

        partials = pl.pallas_call(
            kernel,
            out_shape=jax.ShapeDtypeStruct((ncores, SUBLANE, LANE), jnp.float32),
            grid_spec=pltpu.PrefetchScalarGridSpec(
                num_scalar_prefetch=0,
                grid=(ncores, steps),
                in_specs=in_specs,
                out_specs=pl.BlockSpec((1, SUBLANE, LANE), lambda c, i: (c, 0, 0)),
            ),
            compiler_params=pltpu.CompilerParams(
                dimension_semantics=(core_sem, _ARBITRARY),
                vmem_limit_bytes=48 << 20,
            ),
            cost_estimate=cost,
        )(p2, t2)

        total = total + jnp.sum(partials)

    if n_bulk < n_elems:
        # <=127-element tail: plain jnp in the wrapper (cheaper than padding the
        # whole stream).
        total = total + jnp.sum(_wing_elementwise(p[n_bulk:], t[n_bulk:], w, inv_eps, C))

    return total / jnp.float32(n_elems)


def wing_loss_ref(pred, target, w=2.0, epsilon=2.0):
    """Pure-JAX reference mirroring the PyTorch forward."""
    C = w - w * math.log(1.0 + w / epsilon)
    d = jnp.abs(target.astype(jnp.float32) - pred.astype(jnp.float32))
    loss = jnp.where(d < w, w * jnp.log1p(d / epsilon), d - C)
    return jnp.sum(loss) / d.size


if __name__ == "__main__":
    key = jax.random.PRNGKey(0)
    k1, k2, k3, k4 = jax.random.split(key, 4)

    # Small NCHW-like landmark-prediction tensors (128-aligned element count).
    shape = (2, 4, 16, 16)
    pred = jax.random.normal(k1, shape, dtype=jnp.float32) * 3.0
    target = jax.random.normal(k2, shape, dtype=jnp.float32) * 3.0
    out = jax.block_until_ready(wing_loss(pred, target, w=2.0, epsilon=2.0))
    ref = wing_loss_ref(pred, target, w=2.0, epsilon=2.0)
    assert jnp.allclose(out, ref, rtol=1e-5, atol=1e-5), (out, ref)

    # Misaligned element count: exercises partial-block masking + jnp tail path.
    shape2 = (3, 4, 10, 11)  # 1320 elements = 10*128 bulk + 40 tail
    pred2 = jax.random.normal(k3, shape2, dtype=jnp.float32) * 3.0
    target2 = jax.random.normal(k4, shape2, dtype=jnp.float32) * 3.0
    out2 = jax.block_until_ready(wing_loss(pred2, target2, w=2.0, epsilon=2.0))
    ref2 = wing_loss_ref(pred2, target2, w=2.0, epsilon=2.0)
    assert jnp.allclose(out2, ref2, rtol=1e-5, atol=1e-5), (out2, ref2)

    print("KERNEL_OK")
</pallas_src>

<mosaic_0001>
module attributes {stable_mosaic.version = 11 : i64} {
  func.func @wing_kernel(%arg0: i32, %arg1: i32, %arg2: memref<16x128xf32, #tpu.memory_space<vmem>>, %arg3: memref<16x128xf32, #tpu.memory_space<vmem>>, %arg4: memref<1x8x128xf32, #tpu.memory_space<vmem>>) attributes {dimension_semantics = [#tpu.dimension_semantics<arbitrary>, #tpu.dimension_semantics<arbitrary>], iteration_bounds = array<i64: 1, 1>, scalar_prefetch = 0 : i64, scratch_operands = 0 : i64, tpu.core_type = #tpu.core_type<tc>, window_params = [{transform_indices = @transform_0, window_bounds = array<i64: 16, 128>}, {transform_indices = @transform_1, window_bounds = array<i64: 16, 128>}, {transform_indices = @transform_2, window_bounds = array<i64: 1, 8, 128>}]} {
    %c0_i32 = arith.constant 0 : i32
    %0 = arith.cmpi eq, %arg1, %c0_i32 : i32
    %1 = arith.extui %0 : i1 to i32
    %c0_i32_0 = arith.constant 0 : i32
    %2 = arith.cmpi ne, %1, %c0_i32_0 : i32
    scf.if %2 {
      %cst_14 = arith.constant 0.000000e+00 : f32
      %23 = vector.broadcast %cst_14 : f32 to vector<1x8x128xf32>
      %c0_15 = arith.constant 0 : index
      %c0_16 = arith.constant 0 : index
      %c0_17 = arith.constant 0 : index
      %24 = vector.load %arg4[%c0_15, %c0_16, %c0_17] : memref<1x8x128xf32, #tpu.memory_space<vmem>>, vector<1x8x128xf32>
      tpu.vector_store %arg4[%c0_15, %c0_16, %c0_17], %23 {strides = array<i32>} : memref<1x8x128xf32, #tpu.memory_space<vmem>>, vector<1x8x128xf32>,
    } else {
    }
    %c0 = arith.constant 0 : index
    %c0_1 = arith.constant 0 : index
    %3 = vector.load %arg2[%c0, %c0_1] : memref<16x128xf32, #tpu.memory_space<vmem>>, vector<16x128xf32>
    %c0_2 = arith.constant 0 : index
    %c0_3 = arith.constant 0 : index
    %4 = vector.load %arg3[%c0_2, %c0_3] : memref<16x128xf32, #tpu.memory_space<vmem>>, vector<16x128xf32>
    %5 = arith.subf %4, %3 : vector<16x128xf32>
    %6 = math.absf %5 : vector<16x128xf32>
    %cst = arith.constant 2.000000e+00 : f32
    %7 = vector.broadcast %cst : f32 to vector<16x128xf32>
    %8 = arith.cmpf olt, %6, %7 : vector<16x128xf32>
    %cst_4 = arith.constant 5.000000e-01 : f32
    %9 = vector.broadcast %cst_4 : f32 to vector<16x128xf32>
    %10 = arith.mulf %6, %9 : vector<16x128xf32>
    %11 = math.log1p %10 : vector<16x128xf32>
    %cst_5 = arith.constant 2.000000e+00 : f32
    %12 = vector.broadcast %cst_5 : f32 to vector<16x128xf32>
    %13 = arith.mulf %12, %11 : vector<16x128xf32>
    %cst_6 = arith.constant 0.613705635 : f32
    %14 = vector.broadcast %cst_6 : f32 to vector<16x128xf32>
    %15 = arith.subf %6, %14 : vector<16x128xf32>
    %16 = arith.select %8, %13, %15 : vector<16x128xi1>, vector<16x128xf32>
    %c0_7 = arith.constant 0 : index
    %c0_8 = arith.constant 0 : index
    %c0_9 = arith.constant 0 : index
    %17 = vector.load %arg4[%c0_7, %c0_8, %c0_9] : memref<1x8x128xf32, #tpu.memory_space<vmem>>, vector<1x8x128xf32>
    %18 = vector.shape_cast %16 : vector<16x128xf32> to vector<2x8x128xf32>
    %cst_10 = arith.constant dense<0.000000e+00> : vector<8x128xf32>
    %19 = vector.multi_reduction <add>, %18, %cst_10 [0] : vector<2x8x128xf32> to vector<8x128xf32>
    %20 = vector.shape_cast %19 : vector<8x128xf32> to vector<1x8x128xf32>
    %21 = arith.addf %17, %20 : vector<1x8x128xf32>
    %c0_11 = arith.constant 0 : index
    %c0_12 = arith.constant 0 : index
    %c0_13 = arith.constant 0 : index
    %22 = vector.load %arg4[%c0_11, %c0_12, %c0_13] : memref<1x8x128xf32, #tpu.memory_space<vmem>>, vector<1x8x128xf32>
    tpu.vector_store %arg4[%c0_11, %c0_12, %c0_13], %21 {strides = array<i32>} : memref<1x8x128xf32, #tpu.memory_space<vmem>>, vector<1x8x128xf32>,
    return
  }
  func.func @transform_0(%arg0: i32, %arg1: i32) -> (i32, i32) {
    %c1_i32 = arith.constant 1 : i32
    %0 = arith.muli %arg0, %c1_i32 : i32
    %1 = arith.addi %0, %arg1 : i32
    %c0_i32 = arith.constant 0 : i32
    %c0_i32_0 = arith.constant 0 : i32
    return %1, %c0_i32 : i32, i32
  }
  func.func @transform_1(%arg0: i32, %arg1: i32) -> (i32, i32) {
    %c1_i32 = arith.constant 1 : i32
    %0 = arith.muli %arg0, %c1_i32 : i32
    %1 = arith.addi %0, %arg1 : i32
    %c0_i32 = arith.constant 0 : i32
    %c0_i32_0 = arith.constant 0 : i32
    return %1, %c0_i32 : i32, i32
  }
  func.func @transform_2(%arg0: i32, %arg1: i32) -> (i32, i32, i32) {
    %c0_i32 = arith.constant 0 : i32
    %c0_i32_0 = arith.constant 0 : i32
    %c0_i32_1 = arith.constant 0 : i32
    return %arg0, %c0_i32, %c0_i32_0 : i32, i32, i32
  }
}

</mosaic_0001>

<llo_original>
// kernel: tpu_custom_call.1
$region0: #{tpu_custom_call.1}
  #allocation0 [shape = 'u32[]', space=smem, size = 0x4, offset = 0x4, fixed_abs, tag = 'smem constant byte address 0x4 - core index']
  #allocation1 [shape = 'u32[144,128]{1,0:T(1,128)}', space=vmem, size = 0x12000, scoped, tag = 'internal scratch']
  %s0 = inlined_call_operand.hbm [shape: f32[16,128], index: 0, kind: input, shape index: {}]
  %s1 = inlined_call_operand.hbm [shape: f32[16,128], index: 1, kind: input, shape index: {}]
  %s2 = inlined_call_operand.hbm [shape: f32[1,8,128], index: 2, kind: output, shape index: {}]
  %s3 = sld [smem:[#allocation0]]
  $region30: #{tpu_custom_call.1} parent=0
    _
  %s5 = ssub.s32 1, %s3
  %s6 = scalar_select 0, %s5, %s3
  $region1: #{tpu_custom_call.1} parent=0
    #allocation2 [shape = 'u8[8192]{0}', space=vmem, size = 0x2000, scoped, tag = 'input window, operand 0, single buffered']
    #allocation3 [shape = 's32[1]{0}', space=sflag, size = 0x4, scoped, tag = 'scoped memory for tpu_custom_call.1']
    #allocation4 [shape = 's32[1]{0}', space=sflag, size = 0x4, scoped, tag = 'scoped memory for tpu_custom_call.1']
    #allocation5 [shape = 'u8[8192]{0}', space=vmem, size = 0x2000, scoped, tag = 'input window, operand 1, single buffered']
    #allocation6 [shape = 's32[1]{0}', space=sflag, size = 0x4, scoped, tag = 'scoped memory for tpu_custom_call.1']
    #allocation7 [shape = 'u8[4096]{0}', space=vmem, size = 0x1000, scoped, tag = 'output window, operand 0, single buffered']
    %7 = vsyncpa [#allocation3], 0
    %8 = vsyncpa [#allocation6], 0
    %9 = vsyncpa [#allocation4], 0
    // Predicated region
    $region2: #{tpu_custom_call.1} parent=1 // pred_check
      _
    $region3: #{tpu_custom_call.1} parent=1 // pred_check_branch
      %11 = sbr.rel (0) target = $region5
    $region4: #{tpu_custom_call.1} parent=1 // pred_region
      %s12 = sadd.s32 0, 0
      %s13 = smul.u32 2, %s12
      %s15 = ssub.s32 256, 256
      %16 = vsyncadd [#allocation3], %s15
      %s17 = smul.addr %s13, 128
      %s18 = scalar_lea.hbm %s0, %s17
      %s19 = sshll.u32 [#allocation2], 4
      %s20 = int_to_ptr.vmem [resolvable:$true] %s19
      %25 = dma.hbm_to_vmem [thread:$0]  %s18, 256, %s20, [#allocation3], 128, 128, 8
    $region5: #{tpu_custom_call.1} parent=1 // pred_fallthru
      _
    // Predicated region
    $region6: #{tpu_custom_call.1} parent=1 // pred_check
      _
    $region7: #{tpu_custom_call.1} parent=1 // pred_check_branch
      %27 = sbr.rel (0) target = $region9
    $region8: #{tpu_custom_call.1} parent=1 // pred_region
      %s28 = sadd.s32 0, 0
      %s29 = smul.u32 2, %s28
      %s31 = ssub.s32 256, 256
      %32 = vsyncadd [#allocation6], %s31
      %s33 = smul.addr %s29, 128
      %s34 = scalar_lea.hbm %s1, %s33
      %s35 = sshll.u32 [#allocation5], 4
      %s36 = int_to_ptr.vmem [resolvable:$true] %s35
      %41 = dma.hbm_to_vmem [thread:$0]  %s34, 256, %s36, [#allocation6], 128, 128, 8
    $region9: #{tpu_custom_call.1} parent=1 // pred_fallthru
      _
    // Predicated region
    $region10: #{tpu_custom_call.1} parent=1 // pred_check
      _
    $region11: #{tpu_custom_call.1} parent=1 // pred_check_branch
      %43 = sbr.rel (0) target = $region13
    $region12: #{tpu_custom_call.1} parent=1 // pred_region
      %44 = dma.done [#allocation3], 256
    $region13: #{tpu_custom_call.1} parent=1 // pred_fallthru
      _
    // Predicated region
    $region14: #{tpu_custom_call.1} parent=1 // pred_check
      _
    $region15: #{tpu_custom_call.1} parent=1 // pred_check_branch
      %46 = sbr.rel (0) target = $region17
    $region16: #{tpu_custom_call.1} parent=1 // pred_region
      %47 = dma.done [#allocation6], 256
    $region17: #{tpu_custom_call.1} parent=1 // pred_fallthru
      _
    %s48 = sadd.s32 0, 0
    %s49 = smul.u32 2, %s48
    %s50 = sadd.s32 0, 0
    %s51 = smul.u32 2, %s50
    %p52 = scmp.eq.s32.totalorder 0, 0
    // Predicated region
    $region18: #{tpu_custom_call.1} parent=1 // pred_check
      %p53 = pneg %p52
    $region19: #{tpu_custom_call.1} parent=1 // pred_check_branch
      %55 = sbr.rel (%p53) target = $region21
    $region20: #{tpu_custom_call.1} parent=1 // pred_region
      %56 = vst [vmem:[#allocation7] sm:$0xff] 0.0
    $region21: #{tpu_custom_call.1} parent=1 // pred_fallthru
      _
    %v57 = vld [vmem:[#allocation2] sm:$0xff]
    %v58 = vld [vmem:[#allocation2 + $0x8] sm:$0xff]
    %v59 = vld [vmem:[#allocation5] sm:$0xff]
    %v60 = vld [vmem:[#allocation5 + $0x8] sm:$0xff]
    %v61 = vsub.f32 %v59, %v57
    %v62 = vsub.f32 %v60, %v58
    %v63 = vand.u32 2147483647, %v61
    %v64 = vand.u32 2147483647, %v62
    %vm65 = vcmp.lt.f32.partialorder %v63, 2.0
    %vm66 = vcmp.lt.f32.partialorder %v64, 2.0
    %v67 = vmul.f32 %v63, 0.5
    %v68 = vmul.f32 %v64, 0.5
    %v69 = vadd.f32 %v67, 1.0
    %v70 = vlog2.pop %v69
    %v71 = vmul.f32 %v70, 0.6931472
    %v72 = vmul.f32 -0.5, %v67
    %v73 = vadd.f32 %v72, 1.0
    %v74 = vmul.f32 %v73, %v67
    %v75 = vand.u32 2147483647, %v67
    %vm76 = vcmp.lt.f32.partialorder %v75, 0.0004427343
    %v77 = vsel %vm76, %v74, %v71
    %v78 = vadd.f32 %v68, 1.0
    %v79 = vlog2.pop %v78
    %v80 = vmul.f32 %v79, 0.6931472
    %v81 = vmul.f32 -0.5, %v68
    %v82 = vadd.f32 %v81, 1.0
    %v83 = vmul.f32 %v82, %v68
    %v84 = vand.u32 2147483647, %v68
    %vm85 = vcmp.lt.f32.partialorder %v84, 0.0004427343
    %v86 = vsel %vm85, %v83, %v80
    %v87 = vmul.f32 %v77, 2.0
    %v88 = vmul.f32 %v86, 2.0
    %v89 = vsub.f32 %v63, 0.61370564
    %v90 = vsub.f32 %v64, 0.61370564
    %v91 = vsel %vm65, %v87, %v89
    %v92 = vsel %vm66, %v88, %v90
    %v93 = vld [vmem:[#allocation7] sm:$0xff]
    %v94 = vadd.f32 %v91, %v92
    %v95 = vadd.f32 %v93, %v94
    %96 = vst [vmem:[#allocation7] sm:$0xff] %v95
    // Predicated region
    $region22: #{tpu_custom_call.1} parent=1 // pred_check
      _
    $region23: #{tpu_custom_call.1} parent=1 // pred_check_branch
      %98 = sbr.rel (0) target = $region25
    $region24: #{tpu_custom_call.1} parent=1 // pred_region
      %s100 = ssub.s32 128, 128
      %101 = vsyncadd [#allocation4], %s100
      %s103 = sshll.u32 [#allocation7], 4
      %s104 = int_to_ptr.vmem [resolvable:$true] %s103
      %106 = dma.vmem_to_hbm [thread:$0]  %s104, 128, %s2, [#allocation4]
    $region25: #{tpu_custom_call.1} parent=1 // pred_fallthru
      _
    // Predicated region
    $region26: #{tpu_custom_call.1} parent=1 // pred_check
      _
    $region27: #{tpu_custom_call.1} parent=1 // pred_check_branch
      %108 = sbr.rel (0) target = $region29
    $region28: #{tpu_custom_call.1} parent=1 // pred_region
      %109 = dma.done [#allocation4], 128
    $region29: #{tpu_custom_call.1} parent=1 // pred_fallthru
      _
    %110 = vsyncpa [#allocation3], 1
    %111 = vsyncpa [#allocation6], 1
    %112 = vsyncpa [#allocation4], 1

</llo_original>
